<compile_context>
chip_gen: v7x
topology: tpu7x:2x2x1
jax: 0.10.0
libtpu: 0.0.40
codegen_flags: <defaults>
</compile_context>

<pallas_src>
import numpy as np
import jax
import jax.numpy as jnp
from jax import lax
from jax.experimental import pallas as pl
from jax.experimental.pallas import tpu as pltpu


def _round_up(x, m):
    return ((x + m - 1) // m) * m


def _softplus(x):
    # numerically stable softplus; |x| <= ~1 here (cosine similarities)
    return jnp.maximum(x, 0.0) + jnp.log(1.0 + jnp.exp(-jnp.abs(x)))


def _vmem_bytes_estimate(tm, n, d1, d2, e1, e2):
    tiled = tm * (2 * d1 + 2 * d2 + n + e1 + e2)      # row-tiled inputs (x2 for dbl-buffer)
    resident = n * (e1 + e2)                           # full encode matrices
    interm = 6 * tm * n + 4 * n * (e1 + e2) + 2 * tm * (d1 + d2)
    return 4 * (2 * tiled + 2 * resident + interm + 2 * 128)


def _objective_partials_kernel(s_test_ref, dec_s_ref, se_test_ref, dec_se_ref,
                               addi_ref, enc_s_t_ref, enc_s_f_ref,
                               enc_se_t_ref, enc_se_f_ref, out_ref):
    f32 = jnp.float32
    i = pl.program_id(0)
    tm = addi_ref.shape[0]          # row-tile size (static)
    n = addi_ref.shape[1]           # true Num_Drug (ADDI columns are untiled)

    # Last tile may overhang the arrays; those rows hold garbage, so every
    # row-tiled quantity is gated on this validity mask (jnp.where, not *mask,
    # so garbage NaN/Inf cannot propagate).
    row_ids = i * tm + lax.broadcasted_iota(jnp.int32, (tm, 1), 0)
    valid = row_ids < n             # (tm, 1) bool

    # ---- Loss1 / Loss2: partial sums of squared error (mean taken in wrapper) ----
    d1 = jnp.where(valid, s_test_ref[...].astype(f32) - dec_s_ref[...].astype(f32), 0.0)
    sq1 = jnp.sum(d1 * d1)
    d2 = jnp.where(valid, se_test_ref[...].astype(f32) - dec_se_ref[...].astype(f32), 0.0)
    sq2 = jnp.sum(d2 * d2)

    # ---- Cosine-similarity row block: normalize rows, one MXU matmul each ----
    def _norm_tile(ref):
        e = jnp.where(valid, ref[...].astype(f32), 0.0)
        inv = jnp.where(valid, lax.rsqrt(jnp.sum(e * e, axis=1, keepdims=True)), 0.0)
        return e * inv              # invalid rows -> 0; real zero rows -> NaN (as in torch)

    def _norm_full(ref):
        e = ref[...].astype(f32)
        return e * lax.rsqrt(jnp.sum(e * e, axis=1, keepdims=True))

    dn_nt = (((1,), (1,)), ((), ()))        # contract the feature axis: A @ B^T
    sim_s = lax.dot_general(_norm_tile(enc_s_t_ref), _norm_full(enc_s_f_ref),
                            dn_nt, preferred_element_type=f32)          # (tm, n)
    sim_se = lax.dot_general(_norm_tile(enc_se_t_ref), _norm_full(enc_se_f_ref),
                             dn_nt, preferred_element_type=f32)         # (tm, n)

    # log(1 - sigmoid(x)) = -softplus(x) ; log(sigmoid(x)) = -softplus(-x)
    addi = jnp.where(valid, addi_ref[...].astype(f32), 0.0)
    l3 = jnp.sum((_softplus(sim_s) + _softplus(-sim_se)) * addi)

    # ---- Loss4: trace(G1 H G2 H^T) == || enc_se^T (H enc_s) ||_F^2 ----
    # (H enc_s = enc_s with its column means removed; tiny E2 x E1 matmul.)
    a = enc_s_f_ref[...].astype(f32)                                # (n, E1)
    b = enc_se_f_ref[...].astype(f32)                               # (n, E2)
    a_c = a - jnp.sum(a, axis=0, keepdims=True) * (1.0 / n)         # H @ enc_s
    c = lax.dot_general(b, a_c, (((0,), (0,)), ((), ())),
                        preferred_element_type=f32)                 # (E2, E1)
    raw4 = jnp.sum(c * c)       # identical on every tile; wrapper reads tile 0

    # Pack the four partial scalars into a lane-dense (1,1,128) output block.
    lane = lax.broadcasted_iota(jnp.int32, (1, 1, 128), 2)
    out_ref[...] = (jnp.where(lane == 0, sq1, 0.0)
                    + jnp.where(lane == 1, sq2, 0.0)
                    + jnp.where(lane == 2, l3, 0.0)
                    + jnp.where(lane == 3, raw4, 0.0)).astype(f32)


def objective_function_loss(sample_structure, encode_structure, decode_structure,
                            sample_side_effect, encode_side_effect,
                            decode_side_effect, addi_network, alpha, beta,
                            *, row_tile=512):
    s_test = jnp.asarray(sample_structure)
    enc_s = jnp.asarray(encode_structure)
    dec_s = jnp.asarray(decode_structure)
    se_test = jnp.asarray(sample_side_effect)
    enc_se = jnp.asarray(encode_side_effect)
    dec_se = jnp.asarray(decode_side_effect)
    addi = jnp.asarray(addi_network)

    n, d1 = s_test.shape
    d2 = se_test.shape[1]
    e1 = enc_s.shape[1]
    e2 = enc_se.shape[1]

    # Row-tile size: multiple of 8; shrink until the per-step working set fits
    # comfortably under the scoped-VMEM ceiling (64 MiB keeps v7x safe too).
    tm = max(8, _round_up(min(row_tile, _round_up(n, 8)), 8))
    while tm > 64 and _vmem_bytes_estimate(tm, n, d1, d2, e1, e2) > 48 * 2**20:
        tm = _round_up(tm // 2, 8)
    num_tiles = pl.cdiv(n, tm)
    vmem_limit = int(min(max(2 * _vmem_bytes_estimate(tm, n, d1, d2, e1, e2),
                             32 * 2**20), 64 * 2**20))

    partials = pl.pallas_call(
        _objective_partials_kernel,
        grid=(num_tiles,),
        in_specs=[
            pl.BlockSpec((tm, d1), lambda i: (i, 0)),   # Sample_StructureTest row tile
            pl.BlockSpec((tm, d1), lambda i: (i, 0)),   # DecodeStructure row tile
            pl.BlockSpec((tm, d2), lambda i: (i, 0)),   # Sample_SideEffectTest row tile
            pl.BlockSpec((tm, d2), lambda i: (i, 0)),   # DecodeSideEffect row tile
            pl.BlockSpec((tm, n), lambda i: (i, 0)),    # ADDINetworkTensor row tile
            pl.BlockSpec((tm, e1), lambda i: (i, 0)),   # EncodeStructure row tile
            pl.BlockSpec((n, e1), lambda i: (0, 0)),    # EncodeStructure (resident)
            pl.BlockSpec((tm, e2), lambda i: (i, 0)),   # EncodeSideEffect row tile
            pl.BlockSpec((n, e2), lambda i: (0, 0)),    # EncodeSideEffect (resident)
        ],
        out_specs=pl.BlockSpec((1, 1, 128), lambda i: (i, 0, 0)),
        out_shape=jax.ShapeDtypeStruct((num_tiles, 1, 128), jnp.float32),
        compiler_params=pltpu.CompilerParams(
            dimension_semantics=("parallel",),
            vmem_limit_bytes=vmem_limit),
    )(s_test, dec_s, se_test, dec_se, addi, enc_s, enc_s, enc_se, enc_se)

    # Tiny scalar epilogue: combine per-tile partial sums with Alpha / Beta.
    sq1 = jnp.sum(partials[:, 0, 0])
    sq2 = jnp.sum(partials[:, 0, 1])
    l3 = jnp.sum(partials[:, 0, 2])
    raw4 = partials[0, 0, 3]

    alpha = jnp.float32(alpha)
    beta = jnp.float32(beta)
    loss1 = sq1 / jnp.float32(n * d1)
    loss2 = sq2 / jnp.float32(n * d2)
    loss3 = alpha * l3      # == -Alpha*(sum log(1-sig_s)*ADDI + sum log(sig_se)*ADDI)
    loss4 = -beta * raw4    # == -Beta * trace(G1 H G2 H^T)
    return loss1 + loss2 + loss3 + loss4


def _reference(s_test, enc_s, dec_s, se_test, enc_se, dec_se, addi, alpha, beta):
    """Pure-JAX reference mirroring the PyTorch forward."""
    loss1 = jnp.mean((s_test - dec_s) ** 2)
    loss2 = jnp.mean((se_test - dec_se) ** 2)
    n = s_test.shape[0]

    def cos(E):
        norms = jnp.linalg.norm(E, axis=1).reshape(n, 1)
        return (E @ E.T) / (norms @ norms.reshape(1, n))

    sig_s = 1.0 / (1.0 + jnp.exp(-cos(enc_s)))
    sig_se = 1.0 / (1.0 + jnp.exp(-cos(enc_se)))
    loss3 = -(alpha * (jnp.sum(jnp.log(1.0 - sig_s) * addi)
                       + jnp.sum(jnp.log(sig_se) * addi)))
    H = jnp.eye(n) - jnp.ones((n, n)) / n
    loss4 = -beta * jnp.trace(enc_s @ enc_s.T @ H @ enc_se @ enc_se.T @ H.T)
    return loss1 + loss2 + loss3 + loss4


def _check(key, n, d1, d2, e1, e2, alpha, beta, row_tile):
    ks = jax.random.split(key, 7)
    s_test = jax.random.normal(ks[0], (n, d1), jnp.float32)
    enc_s = jax.random.normal(ks[1], (n, e1), jnp.float32)
    dec_s = jax.random.normal(ks[2], (n, d1), jnp.float32)
    se_test = jax.random.normal(ks[3], (n, d2), jnp.float32)
    enc_se = jax.random.normal(ks[4], (n, e2), jnp.float32)
    dec_se = jax.random.normal(ks[5], (n, d2), jnp.float32)
    addi = jax.random.bernoulli(ks[6], 0.3, (n, n)).astype(jnp.float32)

    loss = objective_function_loss(s_test, enc_s, dec_s, se_test, enc_se,
                                   dec_se, addi, alpha, beta, row_tile=row_tile)
    loss = jax.block_until_ready(loss)
    ref = _reference(s_test, enc_s, dec_s, se_test, enc_se, dec_se, addi,
                     alpha, beta)
    np.testing.assert_allclose(np.asarray(loss), np.asarray(ref),
                               rtol=1e-3, atol=1e-3)


if __name__ == "__main__":
    k0, k1 = jax.random.split(jax.random.PRNGKey(0), 2)
    # Small shapes implied by the module: N drugs, structure / side-effect
    # feature dims, small embedding dims.
    _check(k0, n=8, d1=32, d2=16, e1=8, e2=8,
           alpha=0.5, beta=0.1, row_tile=512)    # single tile, exact fit
    _check(k1, n=20, d1=24, d2=16, e1=8, e2=8,
           alpha=0.7, beta=0.05, row_tile=8)     # 3 row tiles, ragged last tile
    print("KERNEL_OK")
</pallas_src>

<mosaic_0001>
module attributes {stable_mosaic.version = 11 : i64} {
  func.func @_objective_partials_kernel(%arg0: i32, %arg1: memref<8x32xf32, #tpu.memory_space<vmem>>, %arg2: memref<8x32xf32, #tpu.memory_space<vmem>>, %arg3: memref<8x16xf32, #tpu.memory_space<vmem>>, %arg4: memref<8x16xf32, #tpu.memory_space<vmem>>, %arg5: memref<8x8xf32, #tpu.memory_space<vmem>>, %arg6: memref<8x8xf32, #tpu.memory_space<vmem>>, %arg7: memref<8x8xf32, #tpu.memory_space<vmem>>, %arg8: memref<8x8xf32, #tpu.memory_space<vmem>>, %arg9: memref<8x8xf32, #tpu.memory_space<vmem>>, %arg10: memref<1x1x128xf32, #tpu.memory_space<vmem>>) attributes {dimension_semantics = [#tpu.dimension_semantics<parallel>], iteration_bounds = array<i64: 1>, scalar_prefetch = 0 : i64, scratch_operands = 0 : i64, tpu.core_type = #tpu.core_type<tc>, window_params = [{transform_indices = @transform_0, window_bounds = array<i64: 8, 32>}, {transform_indices = @transform_1, window_bounds = array<i64: 8, 32>}, {transform_indices = @transform_2, window_bounds = array<i64: 8, 16>}, {transform_indices = @transform_3, window_bounds = array<i64: 8, 16>}, {transform_indices = @transform_4, window_bounds = array<i64: 8, 8>}, {transform_indices = @transform_5, window_bounds = array<i64: 8, 8>}, {pipeline_mode = #tpu.pipeline_mode<synchronous>, transform_indices = @transform_6, window_bounds = array<i64: 8, 8>}, {transform_indices = @transform_7, window_bounds = array<i64: 8, 8>}, {pipeline_mode = #tpu.pipeline_mode<synchronous>, transform_indices = @transform_8, window_bounds = array<i64: 8, 8>}, {transform_indices = @transform_9, window_bounds = array<i64: 1, 1, 128>}]} {
    %c8_i32 = arith.constant 8 : i32
    %0 = arith.muli %arg0, %c8_i32 : i32
    %1 = tpu.iota {dimensions = array<i32: 0>} : vector<8x1xi32>
    %2 = vector.broadcast %0 : i32 to vector<8x1xi32>
    %3 = arith.addi %2, %1 : vector<8x1xi32>
    %c8_i32_0 = arith.constant 8 : i32
    %4 = vector.broadcast %c8_i32_0 : i32 to vector<8x1xi32>
    %5 = arith.cmpi slt, %3, %4 : vector<8x1xi32>
    %c0 = arith.constant 0 : index
    %c0_1 = arith.constant 0 : index
    %6 = vector.load %arg1[%c0, %c0_1] : memref<8x32xf32, #tpu.memory_space<vmem>>, vector<8x32xf32>
    %c0_2 = arith.constant 0 : index
    %c0_3 = arith.constant 0 : index
    %7 = vector.load %arg2[%c0_2, %c0_3] : memref<8x32xf32, #tpu.memory_space<vmem>>, vector<8x32xf32>
    %8 = arith.subf %6, %7 : vector<8x32xf32>
    %cst = arith.constant 0.000000e+00 : f32
    %9 = vector.shape_cast %5 : vector<8x1xi1> to vector<8x1xi1>
    %10 = vector.broadcast %9 : vector<8x1xi1> to vector<8x32xi1>
    %11 = vector.broadcast %cst : f32 to vector<8x32xf32>
    %12 = arith.select %10, %8, %11 : vector<8x32xi1>, vector<8x32xf32>
    %13 = arith.mulf %12, %12 : vector<8x32xf32>
    %14 = vector.shape_cast %13 : vector<8x32xf32> to vector<1x8x32xf32>
    %cst_4 = arith.constant dense<0.000000e+00> : vector<1xf32>
    %15 = vector.multi_reduction <add>, %14, %cst_4 [1, 2] : vector<1x8x32xf32> to vector<1xf32>
    %16 = vector.shape_cast %15 : vector<1xf32> to vector<1x1x1xf32>
    %17 = vector.extract %16[0, 0, 0] : f32 from vector<1x1x1xf32>
    %c0_5 = arith.constant 0 : index
    %c0_6 = arith.constant 0 : index
    %18 = vector.load %arg3[%c0_5, %c0_6] : memref<8x16xf32, #tpu.memory_space<vmem>>, vector<8x16xf32>
    %c0_7 = arith.constant 0 : index
    %c0_8 = arith.constant 0 : index
    %19 = vector.load %arg4[%c0_7, %c0_8] : memref<8x16xf32, #tpu.memory_space<vmem>>, vector<8x16xf32>
    %20 = arith.subf %18, %19 : vector<8x16xf32>
    %cst_9 = arith.constant 0.000000e+00 : f32
    %21 = vector.shape_cast %5 : vector<8x1xi1> to vector<8x1xi1>
    %22 = vector.broadcast %21 : vector<8x1xi1> to vector<8x16xi1>
    %23 = vector.broadcast %cst_9 : f32 to vector<8x16xf32>
    %24 = arith.select %22, %20, %23 : vector<8x16xi1>, vector<8x16xf32>
    %25 = arith.mulf %24, %24 : vector<8x16xf32>
    %26 = vector.shape_cast %25 : vector<8x16xf32> to vector<1x8x16xf32>
    %cst_10 = arith.constant dense<0.000000e+00> : vector<1xf32>
    %27 = vector.multi_reduction <add>, %26, %cst_10 [1, 2] : vector<1x8x16xf32> to vector<1xf32>
    %28 = vector.shape_cast %27 : vector<1xf32> to vector<1x1x1xf32>
    %29 = vector.extract %28[0, 0, 0] : f32 from vector<1x1x1xf32>
    %c0_11 = arith.constant 0 : index
    %c0_12 = arith.constant 0 : index
    %30 = vector.load %arg6[%c0_11, %c0_12] : memref<8x8xf32, #tpu.memory_space<vmem>>, vector<8x8xf32>
    %cst_13 = arith.constant 0.000000e+00 : f32
    %31 = vector.shape_cast %5 : vector<8x1xi1> to vector<8x1xi1>
    %32 = vector.broadcast %31 : vector<8x1xi1> to vector<8x8xi1>
    %33 = vector.broadcast %cst_13 : f32 to vector<8x8xf32>
    %34 = arith.select %32, %30, %33 : vector<8x8xi1>, vector<8x8xf32>
    %35 = arith.mulf %34, %34 : vector<8x8xf32>
    %cst_14 = arith.constant dense<0.000000e+00> : vector<8xf32>
    %36 = vector.multi_reduction <add>, %35, %cst_14 [1] : vector<8x8xf32> to vector<8xf32>
    %37 = vector.shape_cast %36 : vector<8xf32> to vector<8x1xf32>
    %38 = math.rsqrt %37 : vector<8x1xf32>
    %cst_15 = arith.constant 0.000000e+00 : f32
    %39 = vector.broadcast %cst_15 : f32 to vector<8x1xf32>
    %40 = arith.select %5, %38, %39 : vector<8x1xi1>, vector<8x1xf32>
    %41 = vector.broadcast %40 : vector<8x1xf32> to vector<8x8xf32>
    %42 = arith.mulf %34, %41 : vector<8x8xf32>
    %c0_16 = arith.constant 0 : index
    %c0_17 = arith.constant 0 : index
    %43 = vector.load %arg7[%c0_16, %c0_17] : memref<8x8xf32, #tpu.memory_space<vmem>>, vector<8x8xf32>
    %44 = arith.mulf %43, %43 : vector<8x8xf32>
    %cst_18 = arith.constant dense<0.000000e+00> : vector<8xf32>
    %45 = vector.multi_reduction <add>, %44, %cst_18 [1] : vector<8x8xf32> to vector<8xf32>
    %46 = vector.shape_cast %45 : vector<8xf32> to vector<8x1xf32>
    %47 = math.rsqrt %46 : vector<8x1xf32>
    %48 = vector.broadcast %47 : vector<8x1xf32> to vector<8x8xf32>
    %49 = arith.mulf %43, %48 : vector<8x8xf32>
    %cst_19 = arith.constant dense<0.000000e+00> : vector<8x8xf32>
    %50 = tpu.matmul %42, %49, %cst_19 {dimension_numbers = #tpu.dot_dimension_numbers<[1], [1], [0], [0], [0, 0, 1, 0], [], []>} : vector<8x8xf32>, vector<8x8xf32>, vector<8x8xf32> -> vector<8x8xf32>
    %c0_20 = arith.constant 0 : index
    %c0_21 = arith.constant 0 : index
    %51 = vector.load %arg8[%c0_20, %c0_21] : memref<8x8xf32, #tpu.memory_space<vmem>>, vector<8x8xf32>
    %cst_22 = arith.constant 0.000000e+00 : f32
    %52 = vector.shape_cast %5 : vector<8x1xi1> to vector<8x1xi1>
    %53 = vector.broadcast %52 : vector<8x1xi1> to vector<8x8xi1>
    %54 = vector.broadcast %cst_22 : f32 to vector<8x8xf32>
    %55 = arith.select %53, %51, %54 : vector<8x8xi1>, vector<8x8xf32>
    %56 = arith.mulf %55, %55 : vector<8x8xf32>
    %cst_23 = arith.constant dense<0.000000e+00> : vector<8xf32>
    %57 = vector.multi_reduction <add>, %56, %cst_23 [1] : vector<8x8xf32> to vector<8xf32>
    %58 = vector.shape_cast %57 : vector<8xf32> to vector<8x1xf32>
    %59 = math.rsqrt %58 : vector<8x1xf32>
    %cst_24 = arith.constant 0.000000e+00 : f32
    %60 = vector.broadcast %cst_24 : f32 to vector<8x1xf32>
    %61 = arith.select %5, %59, %60 : vector<8x1xi1>, vector<8x1xf32>
    %62 = vector.broadcast %61 : vector<8x1xf32> to vector<8x8xf32>
    %63 = arith.mulf %55, %62 : vector<8x8xf32>
    %c0_25 = arith.constant 0 : index
    %c0_26 = arith.constant 0 : index
    %64 = vector.load %arg9[%c0_25, %c0_26] : memref<8x8xf32, #tpu.memory_space<vmem>>, vector<8x8xf32>
    %65 = arith.mulf %64, %64 : vector<8x8xf32>
    %cst_27 = arith.constant dense<0.000000e+00> : vector<8xf32>
    %66 = vector.multi_reduction <add>, %65, %cst_27 [1] : vector<8x8xf32> to vector<8xf32>
    %67 = vector.shape_cast %66 : vector<8xf32> to vector<8x1xf32>
    %68 = math.rsqrt %67 : vector<8x1xf32>
    %69 = vector.broadcast %68 : vector<8x1xf32> to vector<8x8xf32>
    %70 = arith.mulf %64, %69 : vector<8x8xf32>
    %cst_28 = arith.constant dense<0.000000e+00> : vector<8x8xf32>
    %71 = tpu.matmul %63, %70, %cst_28 {dimension_numbers = #tpu.dot_dimension_numbers<[1], [1], [0], [0], [0, 0, 1, 0], [], []>} : vector<8x8xf32>, vector<8x8xf32>, vector<8x8xf32> -> vector<8x8xf32>
    %c0_29 = arith.constant 0 : index
    %c0_30 = arith.constant 0 : index
    %72 = vector.load %arg5[%c0_29, %c0_30] : memref<8x8xf32, #tpu.memory_space<vmem>>, vector<8x8xf32>
    %cst_31 = arith.constant 0.000000e+00 : f32
    %73 = vector.shape_cast %5 : vector<8x1xi1> to vector<8x1xi1>
    %74 = vector.broadcast %73 : vector<8x1xi1> to vector<8x8xi1>
    %75 = vector.broadcast %cst_31 : f32 to vector<8x8xf32>
    %76 = arith.select %74, %72, %75 : vector<8x8xi1>, vector<8x8xf32>
    %cst_32 = arith.constant 0.000000e+00 : f32
    %77 = vector.broadcast %cst_32 : f32 to vector<8x8xf32>
    %78 = arith.maximumf %50, %77 : vector<8x8xf32>
    %79 = math.absf %50 : vector<8x8xf32>
    %cst_33 = arith.constant 0.000000e+00 : f32
    %80 = vector.broadcast %cst_33 : f32 to vector<8x8xf32>
    %81 = arith.subf %80, %79 : vector<8x8xf32>
    %82 = math.exp %81 : vector<8x8xf32>
    %cst_34 = arith.constant 1.000000e+00 : f32
    %83 = vector.broadcast %cst_34 : f32 to vector<8x8xf32>
    %84 = arith.addf %83, %82 : vector<8x8xf32>
    %85 = math.log %84 : vector<8x8xf32>
    %86 = arith.addf %78, %85 : vector<8x8xf32>
    %cst_35 = arith.constant 0.000000e+00 : f32
    %87 = vector.broadcast %cst_35 : f32 to vector<8x8xf32>
    %88 = arith.subf %87, %71 : vector<8x8xf32>
    %cst_36 = arith.constant 0.000000e+00 : f32
    %89 = vector.broadcast %cst_36 : f32 to vector<8x8xf32>
    %90 = arith.maximumf %88, %89 : vector<8x8xf32>
    %91 = math.absf %88 : vector<8x8xf32>
    %cst_37 = arith.constant 0.000000e+00 : f32
    %92 = vector.broadcast %cst_37 : f32 to vector<8x8xf32>
    %93 = arith.subf %92, %91 : vector<8x8xf32>
    %94 = math.exp %93 : vector<8x8xf32>
    %cst_38 = arith.constant 1.000000e+00 : f32
    %95 = vector.broadcast %cst_38 : f32 to vector<8x8xf32>
    %96 = arith.addf %95, %94 : vector<8x8xf32>
    %97 = math.log %96 : vector<8x8xf32>
    %98 = arith.addf %90, %97 : vector<8x8xf32>
    %99 = arith.addf %86, %98 : vector<8x8xf32>
    %100 = arith.mulf %99, %76 : vector<8x8xf32>
    %101 = vector.shape_cast %100 : vector<8x8xf32> to vector<1x8x8xf32>
    %cst_39 = arith.constant dense<0.000000e+00> : vector<1xf32>
    %102 = vector.multi_reduction <add>, %101, %cst_39 [1, 2] : vector<1x8x8xf32> to vector<1xf32>
    %103 = vector.shape_cast %102 : vector<1xf32> to vector<1x1x1xf32>
    %104 = vector.extract %103[0, 0, 0] : f32 from vector<1x1x1xf32>
    %c0_40 = arith.constant 0 : index
    %c0_41 = arith.constant 0 : index
    %105 = vector.load %arg7[%c0_40, %c0_41] : memref<8x8xf32, #tpu.memory_space<vmem>>, vector<8x8xf32>
    %c0_42 = arith.constant 0 : index
    %c0_43 = arith.constant 0 : index
    %106 = vector.load %arg9[%c0_42, %c0_43] : memref<8x8xf32, #tpu.memory_space<vmem>>, vector<8x8xf32>
    %cst_44 = arith.constant dense<0.000000e+00> : vector<8xf32>
    %107 = vector.multi_reduction <add>, %105, %cst_44 [0] : vector<8x8xf32> to vector<8xf32>
    %108 = vector.shape_cast %107 : vector<8xf32> to vector<1x8xf32>
    %cst_45 = arith.constant 1.250000e-01 : f32
    %109 = vector.broadcast %cst_45 : f32 to vector<1x8xf32>
    %110 = arith.mulf %108, %109 : vector<1x8xf32>
    %111 = vector.broadcast %110 : vector<1x8xf32> to vector<8x8xf32>
    %112 = arith.subf %105, %111 : vector<8x8xf32>
    %cst_46 = arith.constant dense<0.000000e+00> : vector<8x8xf32>
    %113 = tpu.matmul %106, %112, %cst_46 {dimension_numbers = #tpu.dot_dimension_numbers<[0], [0], [1], [1], [0, 1, 1, 1], [], []>} : vector<8x8xf32>, vector<8x8xf32>, vector<8x8xf32> -> vector<8x8xf32>
    %114 = arith.mulf %113, %113 : vector<8x8xf32>
    %115 = vector.shape_cast %114 : vector<8x8xf32> to vector<1x8x8xf32>
    %cst_47 = arith.constant dense<0.000000e+00> : vector<1xf32>
    %116 = vector.multi_reduction <add>, %115, %cst_47 [1, 2] : vector<1x8x8xf32> to vector<1xf32>
    %117 = vector.shape_cast %116 : vector<1xf32> to vector<1x1x1xf32>
    %118 = vector.extract %117[0, 0, 0] : f32 from vector<1x1x1xf32>
    %119 = tpu.iota {dimensions = array<i32: 2>} : vector<1x1x128xi32>
    %c0_i32 = arith.constant 0 : i32
    %120 = vector.broadcast %c0_i32 : i32 to vector<1x1x128xi32>
    %121 = arith.cmpi eq, %119, %120 : vector<1x1x128xi32>
    %cst_48 = arith.constant 0.000000e+00 : f32
    %122 = vector.broadcast %17 : f32 to vector<1x1x128xf32>
    %123 = vector.broadcast %cst_48 : f32 to vector<1x1x128xf32>
    %124 = arith.select %121, %122, %123 : vector<1x1x128xi1>, vector<1x1x128xf32>
    %c1_i32 = arith.constant 1 : i32
    %125 = vector.broadcast %c1_i32 : i32 to vector<1x1x128xi32>
    %126 = arith.cmpi eq, %119, %125 : vector<1x1x128xi32>
    %cst_49 = arith.constant 0.000000e+00 : f32
    %127 = vector.broadcast %29 : f32 to vector<1x1x128xf32>
    %128 = vector.broadcast %cst_49 : f32 to vector<1x1x128xf32>
    %129 = arith.select %126, %127, %128 : vector<1x1x128xi1>, vector<1x1x128xf32>
    %130 = arith.addf %124, %129 : vector<1x1x128xf32>
    %c2_i32 = arith.constant 2 : i32
    %131 = vector.broadcast %c2_i32 : i32 to vector<1x1x128xi32>
    %132 = arith.cmpi eq, %119, %131 : vector<1x1x128xi32>
    %cst_50 = arith.constant 0.000000e+00 : f32
    %133 = vector.broadcast %104 : f32 to vector<1x1x128xf32>
    %134 = vector.broadcast %cst_50 : f32 to vector<1x1x128xf32>
    %135 = arith.select %132, %133, %134 : vector<1x1x128xi1>, vector<1x1x128xf32>
    %136 = arith.addf %130, %135 : vector<1x1x128xf32>
    %c3_i32 = arith.constant 3 : i32
    %137 = vector.broadcast %c3_i32 : i32 to vector<1x1x128xi32>
    %138 = arith.cmpi eq, %119, %137 : vector<1x1x128xi32>
    %cst_51 = arith.constant 0.000000e+00 : f32
    %139 = vector.broadcast %118 : f32 to vector<1x1x128xf32>
    %140 = vector.broadcast %cst_51 : f32 to vector<1x1x128xf32>
    %141 = arith.select %138, %139, %140 : vector<1x1x128xi1>, vector<1x1x128xf32>
    %142 = arith.addf %136, %141 : vector<1x1x128xf32>
    %c0_52 = arith.constant 0 : index
    %c0_53 = arith.constant 0 : index
    %c0_54 = arith.constant 0 : index
    %143 = vector.load %arg10[%c0_52, %c0_53, %c0_54] : memref<1x1x128xf32, #tpu.memory_space<vmem>>, vector<1x1x128xf32>
    tpu.vector_store %arg10[%c0_52, %c0_53, %c0_54], %142 {strides = array<i32>} : memref<1x1x128xf32, #tpu.memory_space<vmem>>, vector<1x1x128xf32>,
    return
  }
  func.func @transform_0(%arg0: i32) -> (i32, i32) {
    %c0_i32 = arith.constant 0 : i32
    %c0_i32_0 = arith.constant 0 : i32
    return %arg0, %c0_i32 : i32, i32
  }
  func.func @transform_1(%arg0: i32) -> (i32, i32) {
    %c0_i32 = arith.constant 0 : i32
    %c0_i32_0 = arith.constant 0 : i32
    return %arg0, %c0_i32 : i32, i32
  }
  func.func @transform_2(%arg0: i32) -> (i32, i32) {
    %c0_i32 = arith.constant 0 : i32
    %c0_i32_0 = arith.constant 0 : i32
    return %arg0, %c0_i32 : i32, i32
  }
  func.func @transform_3(%arg0: i32) -> (i32, i32) {
    %c0_i32 = arith.constant 0 : i32
    %c0_i32_0 = arith.constant 0 : i32
    return %arg0, %c0_i32 : i32, i32
  }
  func.func @transform_4(%arg0: i32) -> (i32, i32) {
    %c0_i32 = arith.constant 0 : i32
    %c0_i32_0 = arith.constant 0 : i32
    return %arg0, %c0_i32 : i32, i32
  }
  func.func @transform_5(%arg0: i32) -> (i32, i32) {
    %c0_i32 = arith.constant 0 : i32
    %c0_i32_0 = arith.constant 0 : i32
    return %arg0, %c0_i32 : i32, i32
  }
  func.func @transform_6(%arg0: i32) -> (i32, i32) {
    %c0_i32 = arith.constant 0 : i32
    %c0_i32_0 = arith.constant 0 : i32
    %c0_i32_1 = arith.constant 0 : i32
    return %c0_i32, %c0_i32_0 : i32, i32
  }
  func.func @transform_7(%arg0: i32) -> (i32, i32) {
    %c0_i32 = arith.constant 0 : i32
    %c0_i32_0 = arith.constant 0 : i32
    return %arg0, %c0_i32 : i32, i32
  }
  func.func @transform_8(%arg0: i32) -> (i32, i32) {
    %c0_i32 = arith.constant 0 : i32
    %c0_i32_0 = arith.constant 0 : i32
    %c0_i32_1 = arith.constant 0 : i32
    return %c0_i32, %c0_i32_0 : i32, i32
  }
  func.func @transform_9(%arg0: i32) -> (i32, i32, i32) {
    %c0_i32 = arith.constant 0 : i32
    %c0_i32_0 = arith.constant 0 : i32
    %c0_i32_1 = arith.constant 0 : i32
    return %arg0, %c0_i32, %c0_i32_0 : i32, i32, i32
  }
}

</mosaic_0001>

<llo_original>
// kernel: tpu_custom_call.1
$region0: #{tpu_custom_call.1}
  #allocation0 [shape = 'u32[]', space=smem, size = 0x4, offset = 0x4, fixed_abs, tag = 'smem constant byte address 0x4 - core index']
  #allocation1 [shape = 'u32[144,128]{1,0:T(1,128)}', space=vmem, size = 0x12000, scoped, tag = 'internal scratch']
  %s0 = inlined_call_operand.hbm [shape: f32[8,32], index: 0, kind: input, shape index: {}]
  %s1 = inlined_call_operand.hbm [shape: f32[8,32], index: 1, kind: input, shape index: {}]
  %s2 = inlined_call_operand.hbm [shape: f32[8,16], index: 2, kind: input, shape index: {}]
  %s3 = inlined_call_operand.vmem [shape: f32[8,16], index: 3, kind: input, shape index: {}]
  %s4 = inlined_call_operand.hbm [shape: f32[8,8], index: 4, kind: input, shape index: {}]
  %s5 = inlined_call_operand.vmem [shape: f32[8,8], index: 5, kind: input, shape index: {}]
  %s6 = inlined_call_operand.hbm [shape: f32[8,8], index: 6, kind: input, shape index: {}]
  %s7 = inlined_call_operand.vmem [shape: f32[8,8], index: 7, kind: input, shape index: {}]
  %s8 = inlined_call_operand.hbm [shape: f32[8,8], index: 8, kind: input, shape index: {}]
  %s9 = inlined_call_operand.hbm [shape: f32[1,1,128], index: 9, kind: output, shape index: {}]
  %s10 = sld [smem:[#allocation0]]
  $region70: #{tpu_custom_call.1} parent=0
    _
  %s12 = ssub.s32 1, %s10
  %s13 = scalar_select 0, %s12, %s10
  $region1: #{tpu_custom_call.1} parent=0
    #allocation2 [shape = 'u8[4096]{0}', space=vmem, size = 0x1000, scoped, tag = 'input window, operand 0, single buffered']
    #allocation3 [shape = 's32[1]{0}', space=sflag, size = 0x4, scoped, tag = 'scoped memory for tpu_custom_call.1']
    #allocation4 [shape = 's32[1]{0}', space=sflag, size = 0x4, scoped, tag = 'scoped memory for tpu_custom_call.1']
    #allocation5 [shape = 'u8[4096]{0}', space=vmem, size = 0x1000, scoped, tag = 'input window, operand 1, single buffered']
    #allocation6 [shape = 's32[1]{0}', space=sflag, size = 0x4, scoped, tag = 'scoped memory for tpu_custom_call.1']
    #allocation7 [shape = 'u8[4096]{0}', space=vmem, size = 0x1000, scoped, tag = 'input window, operand 2, single buffered']
    #allocation8 [shape = 'u8[4096]{0}', space=vmem, size = 0x1000, scoped, tag = 'input window, operand 4, single buffered']
    #allocation9 [shape = 's32[1]{0}', space=sflag, size = 0x4, scoped, tag = 'scoped memory for tpu_custom_call.1']
    #allocation10 [shape = 'u8[4096]{0}', space=vmem, size = 0x1000, scoped, tag = 'input window, operand 6, single buffered']
    #allocation11 [shape = 'u8[4096]{0}', space=vmem, size = 0x1000, scoped, tag = 'input window, operand 8, single buffered']
    #allocation12 [shape = 's32[1]{0}', space=sflag, size = 0x4, scoped, tag = 'scoped memory for tpu_custom_call.1']
    #allocation13 [shape = 'u8[512]{0}', space=vmem, size = 0x400, scoped, tag = 'output window, operand 0, single buffered']
    %14 = vsyncpa [#allocation3], 0
    %15 = vsyncpa [#allocation6], 0
    %16 = vsyncpa [#allocation9], 0
    %17 = vsyncpa [#allocation12], 0
    %18 = vsyncpa [#allocation4], 0
    // Predicated region
    $region2: #{tpu_custom_call.1} parent=1 // pred_check
      _
    $region3: #{tpu_custom_call.1} parent=1 // pred_check_branch
      %20 = sbr.rel (0) target = $region5
    $region4: #{tpu_custom_call.1} parent=1 // pred_region
      %s22 = ssub.s32 128, 128
      %23 = vsyncadd [#allocation3], %s22
      %s25 = sshll.u32 [#allocation2], 4
      %s26 = int_to_ptr.vmem [resolvable:$true] %s25
      %28 = dma.hbm_to_vmem [thread:$0]  %s0, 128, %s26, [#allocation3]
    $region5: #{tpu_custom_call.1} parent=1 // pred_fallthru
      _
    // Predicated region
    $region6: #{tpu_custom_call.1} parent=1 // pred_check
      _
    $region7: #{tpu_custom_call.1} parent=1 // pred_check_branch
      %30 = sbr.rel (0) target = $region9
    $region8: #{tpu_custom_call.1} parent=1 // pred_region
      %s32 = ssub.s32 128, 128
      %33 = vsyncadd [#allocation6], %s32
      %s35 = sshll.u32 [#allocation5], 4
      %s36 = int_to_ptr.vmem [resolvable:$true] %s35
      %38 = dma.hbm_to_vmem [thread:$0]  %s1, 128, %s36, [#allocation6]
    $region9: #{tpu_custom_call.1} parent=1 // pred_fallthru
      _
    // Predicated region
    $region10: #{tpu_custom_call.1} parent=1 // pred_check
      _
    $region11: #{tpu_custom_call.1} parent=1 // pred_check_branch
      %40 = sbr.rel (0) target = $region13
    $region12: #{tpu_custom_call.1} parent=1 // pred_region
      %s42 = ssub.s32 128, 128
      %43 = vsyncadd [#allocation6], %s42
      %s45 = sshll.u32 [#allocation7], 4
      %s46 = int_to_ptr.vmem [resolvable:$true] %s45
      %48 = dma.hbm_to_vmem [thread:$0]  %s2, 128, %s46, [#allocation6]
    $region13: #{tpu_custom_call.1} parent=1 // pred_fallthru
      _
    // Predicated region
    $region14: #{tpu_custom_call.1} parent=1 // pred_check
      _
    $region15: #{tpu_custom_call.1} parent=1 // pred_check_branch
      %50 = sbr.rel (0) target = $region17
    $region16: #{tpu_custom_call.1} parent=1 // pred_region
      _
    $region17: #{tpu_custom_call.1} parent=1 // pred_fallthru
      _
    // Predicated region
    $region18: #{tpu_custom_call.1} parent=1 // pred_check
      _
    $region19: #{tpu_custom_call.1} parent=1 // pred_check_branch
      %52 = sbr.rel (0) target = $region21
    $region20: #{tpu_custom_call.1} parent=1 // pred_region
      %s54 = ssub.s32 128, 128
      %55 = vsyncadd [#allocation9], %s54
      %s57 = sshll.u32 [#allocation8], 4
      %s58 = int_to_ptr.vmem [resolvable:$true] %s57
      %60 = dma.hbm_to_vmem [thread:$0]  %s4, 128, %s58, [#allocation9]
    $region21: #{tpu_custom_call.1} parent=1 // pred_fallthru
      _
    // Predicated region
    $region22: #{tpu_custom_call.1} parent=1 // pred_check
      _
    $region23: #{tpu_custom_call.1} parent=1 // pred_check_branch
      %62 = sbr.rel (0) target = $region25
    $region24: #{tpu_custom_call.1} parent=1 // pred_region
      _
    $region25: #{tpu_custom_call.1} parent=1 // pred_fallthru
      _
    // Predicated region
    $region26: #{tpu_custom_call.1} parent=1 // pred_check
      _
    $region27: #{tpu_custom_call.1} parent=1 // pred_check_branch
      %64 = sbr.rel (0) target = $region29
    $region28: #{tpu_custom_call.1} parent=1 // pred_region
      %s66 = ssub.s32 128, 128
      %67 = vsyncadd [#allocation9], %s66
      %s69 = sshll.u32 [#allocation10], 4
      %s70 = int_to_ptr.vmem [resolvable:$true] %s69
      %72 = dma.hbm_to_vmem [thread:$0]  %s6, 128, %s70, [#allocation9]
    $region29: #{tpu_custom_call.1} parent=1 // pred_fallthru
      _
    // Predicated region
    $region30: #{tpu_custom_call.1} parent=1 // pred_check
      _
    $region31: #{tpu_custom_call.1} parent=1 // pred_check_branch
      %74 = sbr.rel (0) target = $region33
    $region32: #{tpu_custom_call.1} parent=1 // pred_region
      _
    $region33: #{tpu_custom_call.1} parent=1 // pred_fallthru
      _
    // Predicated region
    $region34: #{tpu_custom_call.1} parent=1 // pred_check
      _
    $region35: #{tpu_custom_call.1} parent=1 // pred_check_branch
      %76 = sbr.rel (0) target = $region37
    $region36: #{tpu_custom_call.1} parent=1 // pred_region
      %s78 = ssub.s32 128, 128
      %79 = vsyncadd [#allocation12], %s78
      %s81 = sshll.u32 [#allocation11], 4
      %s82 = int_to_ptr.vmem [resolvable:$true] %s81
      %84 = dma.hbm_to_vmem [thread:$0]  %s8, 128, %s82, [#allocation12]
    $region37: #{tpu_custom_call.1} parent=1 // pred_fallthru
      _
    // Predicated region
    $region38: #{tpu_custom_call.1} parent=1 // pred_check
      _
    $region39: #{tpu_custom_call.1} parent=1 // pred_check_branch
      %86 = sbr.rel (0) target = $region41
    $region40: #{tpu_custom_call.1} parent=1 // pred_region
      %87 = dma.done [#allocation3], 128
    $region41: #{tpu_custom_call.1} parent=1 // pred_fallthru
      _
    // Predicated region
    $region42: #{tpu_custom_call.1} parent=1 // pred_check
      _
    $region43: #{tpu_custom_call.1} parent=1 // pred_check_branch
      %89 = sbr.rel (0) target = $region45
    $region44: #{tpu_custom_call.1} parent=1 // pred_region
      %90 = dma.done [#allocation6], 128
    $region45: #{tpu_custom_call.1} parent=1 // pred_fallthru
      _
    // Predicated region
    $region46: #{tpu_custom_call.1} parent=1 // pred_check
      _
    $region47: #{tpu_custom_call.1} parent=1 // pred_check_branch
      %92 = sbr.rel (0) target = $region49
    $region48: #{tpu_custom_call.1} parent=1 // pred_region
      %93 = dma.done [#allocation6], 128
    $region49: #{tpu_custom_call.1} parent=1 // pred_fallthru
      _
    // Predicated region
    $region50: #{tpu_custom_call.1} parent=1 // pred_check
      _
    $region51: #{tpu_custom_call.1} parent=1 // pred_check_branch
      %95 = sbr.rel (0) target = $region53
    $region52: #{tpu_custom_call.1} parent=1 // pred_region
      %96 = dma.done [#allocation9], 128
    $region53: #{tpu_custom_call.1} parent=1 // pred_fallthru
      _
    // Predicated region
    $region54: #{tpu_custom_call.1} parent=1 // pred_check
      _
    $region55: #{tpu_custom_call.1} parent=1 // pred_check_branch
      %98 = sbr.rel (0) target = $region57
    $region56: #{tpu_custom_call.1} parent=1 // pred_region
      %99 = dma.done [#allocation9], 128
    $region57: #{tpu_custom_call.1} parent=1 // pred_fallthru
      _
    // Predicated region
    $region58: #{tpu_custom_call.1} parent=1 // pred_check
      _
    $region59: #{tpu_custom_call.1} parent=1 // pred_check_branch
      %101 = sbr.rel (0) target = $region61
    $region60: #{tpu_custom_call.1} parent=1 // pred_region
      %102 = dma.done [#allocation12], 128
    $region61: #{tpu_custom_call.1} parent=1 // pred_fallthru
      _
    %s103 = smul.u32 0, 8
    %v104 = vlaneseq
    %v105 = vshrl.u32 %v104, 7
    %v106 = vstv %s103
    %v107 = vadd.s32 %v106, %v105
    %vm108 = vcmp.lt.s32.totalorder %v107, 8
    %v109 = vld [vmem:[#allocation2] sm:$0xff]
    %v110 = vld [vmem:[#allocation5] sm:$0xff]
    %v111 = vsub.f32 %v109, %v110
    %v112 = vsel %vm108, 1, 0
    %vm113 = vcmp.eq.s32.totalorder %v112, 1
    %v114 = vsel %vm113, %v111, 0.0
    %v115 = vmul.f32 %v114, %v114
    %vm116 = vcmask 261120
    %v117 = vsel %vm116, %v115, 0.0
    %118 = vadd.xlane.f32.xlu0 %v117
    %v119 = vpop.xlane.xlu0 %118
    %v120 = vrot.slane %v119, 4
    %v121 = vadd.f32 %v119, %v120
    %v122 = vrot.slane %v121, 2
    %v123 = vadd.f32 %v121, %v122
    %v124 = vrot.slane %v123, 1
    %v125 = vadd.f32 %v123, %v124
    %s126 = vtos %v125
    %v127 = vld [vmem:[#allocation7] sm:$0xff]
    %v128 = vld [vmem:[%s3] sm:$0xff]
    %v129 = vsub.f32 %v127, %v128
    %v130 = vsel %vm113, %v129, 0.0
    %v131 = vmul.f32 %v130, %v130
    %vm132 = vcmask 130048
    %v133 = vsel %vm132, %v131, 0.0
    %134 = vadd.xlane.f32.xlu0 %v133
    %v135 = vpop.xlane.xlu0 %134
    %v136 = vrot.slane %v135, 4
    %v137 = vadd.f32 %v135, %v136
    %v138 = vrot.slane %v137, 2
    %v139 = vadd.f32 %v137, %v138
    %v140 = vrot.slane %v139, 1
    %v141 = vadd.f32 %v139, %v140
    %s142 = vtos %v141
    %v143 = vld [vmem:[%s5] sm:$0xff]
    %v144 = vsel %vm113, %v143, 0.0
    %v145 = vmul.f32 %v144, %v144
    %vm146 = vcmask 64512
    %v147 = vsel %vm146, %v145, 0.0
    %148 = vadd.xlane.f32.xlu0 %v147
    %v149 = vpop.xlane.xlu0 %148
    %v150 = vrsqrt.pop %v149
    %v151 = vsel %vm108, %v150, 0.0
    %v152 = vmul.f32 %v144, %v151
    %v153 = vld [vmem:[#allocation10] sm:$0xff]
    %v154 = vmul.f32 %v153, %v153
    %v155 = vsel %vm146, %v154, 0.0
    %156 = vadd.xlane.f32.xlu0 %v155
    %v157 = vpop.xlane.xlu0 %156
    %v158 = vrsqrt.pop %v157
    %v159 = vmul.f32 %v153, %v158
    %v161 = vsel %vm146, %v152, 0
    %v164 = vsel %vm146, %v159, 0
    %166 = vmatprep.subr.mxu0 0.0
    %167 = vmatpush1.xpose.msra.mxu0 %v164
    %168 = vmatprep.subr.mxu0 0.0
    %169 = vmatpush1.xpose.msra.mxu0 0.0
    %170 = vmatprep.subr.mxu0 0.0
    %171 = vmatpush1.xpose.msra.mxu0 0.0
    %172 = vmatprep.subr.mxu0 0.0
    %173 = vmatpush1.xpose.msra.mxu0 0.0
    %174 = vmatprep.subr.mxu0 0.0
    %175 = vmatpush1.xpose.msra.mxu0 0.0
    %176 = vmatprep.subr.mxu0 0.0
    %177 = vmatpush1.xpose.msra.mxu0 0.0
    %178 = vmatprep.subr.mxu0 0.0
    %179 = vmatpush1.xpose.msra.mxu0 0.0
    %180 = vmatprep.subr.mxu0 0.0
    %181 = vmatpush1.xpose.msra.mxu0 0.0
    %182 = vmatprep.subr.mxu0 0.0
    %183 = vmatpush1.xpose.msra.mxu0 0.0
    %184 = vmatprep.subr.mxu0 0.0
    %185 = vmatpush1.xpose.msra.mxu0 0.0
    %186 = vmatprep.subr.mxu0 0.0
    %187 = vmatpush1.xpose.msra.mxu0 0.0
    %188 = vmatprep.subr.mxu0 0.0
    %189 = vmatpush1.xpose.msra.mxu0 0.0
    %190 = vmatprep.subr.mxu0 0.0
    %191 = vmatpush1.xpose.msra.mxu0 0.0
    %192 = vmatprep.subr.mxu0 0.0
    %193 = vmatpush1.xpose.msra.mxu0 0.0
    %194 = vmatprep.subr.mxu0 0.0
    %195 = vmatpush1.xpose.msra.mxu0 0.0
    %196 = vmatprep.subr.mxu0 0.0
    %197 = vmatpush1.xpose.msra.mxu0 0.0
    %198 = vmatprep.subr.mxu0 0.0
    %199 = vmatpush1.xpose.msra.mxu0 0.0
    %200 = vmatprep.subr.mxu0 0.0
    %201 = vmatpush1.xpose.msra.mxu0 0.0
    %202 = vmatprep.subr.mxu0 0.0
    %203 = vmatpush1.xpose.msra.mxu0 0.0
    %204 = vmatprep.subr.mxu0 0.0
    %205 = vmatpush1.xpose.msra.mxu0 0.0
    %206 = vmatprep.subr.mxu0 0.0
    %207 = vmatpush1.xpose.msra.mxu0 0.0
    %208 = vmatprep.subr.mxu0 0.0
    %209 = vmatpush1.xpose.msra.mxu0 0.0
    %210 = vmatprep.subr.mxu0 0.0
    %211 = vmatpush1.xpose.msra.mxu0 0.0
    %212 = vmatprep.subr.mxu0 0.0
    %213 = vmatpush1.xpose.msra.mxu0 0.0
    %214 = vmatprep.subr.mxu0 0.0
    %215 = vmatpush1.xpose.msra.mxu0 0.0
    %216 = vmatprep.subr.mxu0 0.0
    %217 = vmatpush1.xpose.msra.mxu0 0.0
    %218 = vmatprep.subr.mxu0 0.0
    %219 = vmatpush1.xpose.msra.mxu0 0.0
    %220 = vmatprep.subr.mxu0 0.0
    %221 = vmatpush1.xpose.msra.mxu0 0.0
    %222 = vmatprep.subr.mxu0 0.0
    %223 = vmatpush1.xpose.msra.mxu0 0.0
    %224 = vmatprep.subr.mxu0 0.0
    %225 = vmatpush1.xpose.msra.mxu0 0.0
    %226 = vmatprep.subr.mxu0 0.0
    %227 = vmatpush1.xpose.msra.mxu0 0.0
    %228 = vmatprep.subr.mxu0 0.0
    %229 = vmatpush1.xpose.msra.mxu0 0.0
    %230 = vmatprep.mubr.f32.mxu0 0.0
    %231 = vmatmul.mubr.f32.gmra.mrb[0].mxu0 %v161
    %v232 = vpop.f32.mrb[0].mxu0
    %v233 = vadd.f32 0.0, %v232
    %v234 = vpop.f32.mrb[0].mxu0
    %235 = vdwg.mxu0
    %v236 = vld [vmem:[%s7] sm:$0xff]
    %v237 = vsel %vm113, %v236, 0.0
    %v238 = vmul.f32 %v237, %v237
    %v239 = vsel %vm146, %v238, 0.0
    %240 = vadd.xlane.f32.xlu0 %v239
    %v241 = vpop.xlane.xlu0 %240
    %v242 = vrsqrt.pop %v241
    %v243 = vsel %vm108, %v242, 0.0
    %v244 = vmul.f32 %v237, %v243
    %v245 = vld [vmem:[#allocation11] sm:$0xff]
    %v246 = vmul.f32 %v245, %v245
    %v247 = vsel %vm146, %v246, 0.0
    %248 = vadd.xlane.f32.xlu0 %v247
    %v249 = vpop.xlane.xlu0 %248
    %v250 = vrsqrt.pop %v249
    %v251 = vmul.f32 %v245, %v250
    %v253 = vsel %vm146, %v244, 0
    %v256 = vsel %vm146, %v251, 0
    %258 = vmatprep.subr.mxu0 0.0
    %259 = vmatpush1.xpose.msra.mxu0 %v256
    %260 = vmatprep.subr.mxu0 0.0
    %261 = vmatpush1.xpose.msra.mxu0 0.0
    %262 = vmatprep.subr.mxu0 0.0
    %263 = vmatpush1.xpose.msra.mxu0 0.0
    %264 = vmatprep.subr.mxu0 0.0
    %265 = vmatpush1.xpose.msra.mxu0 0.0
    %266 = vmatprep.subr.mxu0 0.0
    %267 = vmatpush1.xpose.msra.mxu0 0.0
    %268 = vmatprep.subr.mxu0 0.0
    %269 = vmatpush1.xpose.msra.mxu0 0.0
    %270 = vmatprep.subr.mxu0 0.0
    %271 = vmatpush1.xpose.msra.mxu0 0.0
    %272 = vmatprep.subr.mxu0 0.0
    %273 = vmatpush1.xpose.msra.mxu0 0.0
    %274 = vmatprep.subr.mxu0 0.0
    %275 = vmatpush1.xpose.msra.mxu0 0.0
    %276 = vmatprep.subr.mxu0 0.0
    %277 = vmatpush1.xpose.msra.mxu0 0.0
    %278 = vmatprep.subr.mxu0 0.0
    %279 = vmatpush1.xpose.msra.mxu0 0.0
    %280 = vmatprep.subr.mxu0 0.0
    %281 = vmatpush1.xpose.msra.mxu0 0.0
    %282 = vmatprep.subr.mxu0 0.0
    %283 = vmatpush1.xpose.msra.mxu0 0.0
    %284 = vmatprep.subr.mxu0 0.0
    %285 = vmatpush1.xpose.msra.mxu0 0.0
    %286 = vmatprep.subr.mxu0 0.0
    %287 = vmatpush1.xpose.msra.mxu0 0.0
    %288 = vmatprep.subr.mxu0 0.0
    %289 = vmatpush1.xpose.msra.mxu0 0.0
    %290 = vmatprep.subr.mxu0 0.0
    %291 = vmatpush1.xpose.msra.mxu0 0.0
    %292 = vmatprep.subr.mxu0 0.0
    %293 = vmatpush1.xpose.msra.mxu0 0.0
    %294 = vmatprep.subr.mxu0 0.0
    %295 = vmatpush1.xpose.msra.mxu0 0.0
    %296 = vmatprep.subr.mxu0 0.0
    %297 = vmatpush1.xpose.msra.mxu0 0.0
    %298 = vmatprep.subr.mxu0 0.0
    %299 = vmatpush1.xpose.msra.mxu0 0.0
    %300 = vmatprep.subr.mxu0 0.0
    %301 = vmatpush1.xpose.msra.mxu0 0.0
    %302 = vmatprep.subr.mxu0 0.0
    %303 = vmatpush1.xpose.msra.mxu0 0.0
    %304 = vmatprep.subr.mxu0 0.0
    %305 = vmatpush1.xpose.msra.mxu0 0.0
    %306 = vmatprep.subr.mxu0 0.0
    %307 = vmatpush1.xpose.msra.mxu0 0.0
    %308 = vmatprep.subr.mxu0 0.0
    %309 = vmatpush1.xpose.msra.mxu0 0.0
    %310 = vmatprep.subr.mxu0 0.0
    %311 = vmatpush1.xpose.msra.mxu0 0.0
    %312 = vmatprep.subr.mxu0 0.0
    %313 = vmatpush1.xpose.msra.mxu0 0.0
    %314 = vmatprep.subr.mxu0 0.0
    %315 = vmatpush1.xpose.msra.mxu0 0.0
    %316 = vmatprep.subr.mxu0 0.0
    %317 = vmatpush1.xpose.msra.mxu0 0.0
    %318 = vmatprep.subr.mxu0 0.0
    %319 = vmatpush1.xpose.msra.mxu0 0.0
    %320 = vmatprep.subr.mxu0 0.0
    %321 = vmatpush1.xpose.msra.mxu0 0.0
    %322 = vmatprep.mubr.f32.mxu0 0.0
    %323 = vmatmul.mubr.f32.gmra.mrb[0].mxu0 %v253
    %v324 = vpop.f32.mrb[0].mxu0
    %v325 = vadd.f32 0.0, %v324
    %v326 = vpop.f32.mrb[0].mxu0
    %327 = vdwg.mxu0
    %v328 = vld [vmem:[#allocation8] sm:$0xff]
    %v329 = vsel %vm113, %v328, 0.0
    %v330 = vmax.f32 %v233, 0.0
    %v331 = vand.u32 2147483647, %v233
    %v332 = vsub.f32 0.0, %v331
    %v333 = vmul.f32 %v332, 1.442695
    %v334 = vpow.pop %v333
    %v335 = vadd.f32 %v334, 1.0
    %v336 = vlog2.pop %v335
    %v337 = vmul.f32 %v336, 0.6931472
    %v338 = vadd.f32 %v330, %v337
    %v339 = vsub.f32 0.0, %v325
    %v340 = vmax.f32 %v339, 0.0
    %v341 = vand.u32 2147483647, %v339
    %v342 = vsub.f32 0.0, %v341
    %v343 = vmul.f32 %v342, 1.442695
    %v344 = vpow.pop %v343
    %v345 = vadd.f32 %v344, 1.0
    %v346 = vlog2.pop %v345
    %v347 = vmul.f32 %v346, 0.6931472
    %v348 = vadd.f32 %v340, %v347
    %v349 = vadd.f32 %v338, %v348
    %v350 = vmul.f32 %v349, %v329
    %v351 = vsel %vm146, %v350, 0.0
    %352 = vadd.xlane.f32.xlu0 %v351
    %v353 = vpop.xlane.xlu0 %352
    %v354 = vrot.slane %v353, 4
    %v355 = vadd.f32 %v353, %v354
    %v356 = vrot.slane %v355, 2
    %v357 = vadd.f32 %v355, %v356
    %v358 = vrot.slane %v357, 1
    %v359 = vadd.f32 %v357, %v358
    %s360 = vtos %v359
    %v361 = vsel %vm146, %v153, 0.0
    %v362 = vrot.slane %v361, 4
    %v363 = vadd.f32 %v361, %v362
    %v364 = vrot.slane %v363, 2
    %v365 = vadd.f32 %v363, %v364
    %v366 = vrot.slane %v365, 1
    %v367 = vadd.f32 %v365, %v366
    %v368 = vmul.f32 %v367, 0.125
    %v369 = vsub.f32 %v153, %v368
    %370 = vxpose.xlu0.b32.start [1/16] %v245, 128
    %371 = vxpose.xlu0.b32.cont [2/16] 0.0, 128
    %372 = vxpose.xlu0.b32.cont [3/16] 0.0, 128
    %373 = vxpose.xlu0.b32.cont [4/16] 0.0, 128
    %374 = vxpose.xlu0.b32.cont [5/16] 0.0, 128
    %375 = vxpose.xlu0.b32.cont [6/16] 0.0, 128
    %376 = vxpose.xlu0.b32.cont [7/16] 0.0, 128
    %377 = vxpose.xlu0.b32.cont [8/16] 0.0, 128
    %378 = vxpose.xlu0.b32.cont [9/16] 0.0, 128
    %379 = vxpose.xlu0.b32.cont [10/16] 0.0, 128
    %380 = vxpose.xlu0.b32.cont [11/16] 0.0, 128
    %381 = vxpose.xlu0.b32.cont [12/16] 0.0, 128
    %382 = vxpose.xlu0.b32.cont [13/16] 0.0, 128
    %383 = vxpose.xlu0.b32.cont [14/16] 0.0, 128
    %384 = vxpose.xlu0.b32.cont [15/16] 0.0, 128
    %385 = vxpose.xlu0.b32.end [16/16] 0.0, 128
    %v386 = vpop.trf.xlu0
    %v387 = vpop.trf.xlu0
    %v388 = vpop.trf.xlu0
    %v389 = vpop.trf.xlu0
    %v390 = vpop.trf.xlu0
    %v391 = vpop.trf.xlu0
    %v392 = vpop.trf.xlu0
    %v393 = vpop.trf.xlu0
    %v394 = vpop.trf.xlu0
    %v395 = vpop.trf.xlu0
    %v396 = vpop.trf.xlu0
    %v397 = vpop.trf.xlu0
    %v398 = vpop.trf.xlu0
    %v399 = vpop.trf.xlu0
    %v400 = vpop.trf.xlu0
    %v401 = vpop.trf.xlu0
    %v403 = vsel %vm146, %v386, 0
    %405 = vmatprep.subr.mxu0 0.0
    %406 = vmatpush1.msra.mxu0 %v369
    %407 = vmatprep.subr.mxu0 0.0
    %408 = vmatpush1.msra.mxu0 0.0
    %409 = vmatprep.subr.mxu0 0.0
    %410 = vmatpush1.msra.mxu0 0.0
    %411 = vmatprep.subr.mxu0 0.0
    %412 = vmatpush1.msra.mxu0 0.0
    %413 = vmatprep.subr.mxu0 0.0
    %414 = vmatpush1.msra.mxu0 0.0
    %415 = vmatprep.subr.mxu0 0.0
    %416 = vmatpush1.msra.mxu0 0.0
    %417 = vmatprep.subr.mxu0 0.0
    %418 = vmatpush1.msra.mxu0 0.0
    %419 = vmatprep.subr.mxu0 0.0
    %420 = vmatpush1.msra.mxu0 0.0
    %421 = vmatprep.subr.mxu0 0.0
    %422 = vmatpush1.msra.mxu0 0.0
    %423 = vmatprep.subr.mxu0 0.0
    %424 = vmatpush1.msra.mxu0 0.0
    %425 = vmatprep.subr.mxu0 0.0
    %426 = vmatpush1.msra.mxu0 0.0
    %427 = vmatprep.subr.mxu0 0.0
    %428 = vmatpush1.msra.mxu0 0.0
    %429 = vmatprep.subr.mxu0 0.0
    %430 = vmatpush1.msra.mxu0 0.0
    %431 = vmatprep.subr.mxu0 0.0
    %432 = vmatpush1.msra.mxu0 0.0
    %433 = vmatprep.subr.mxu0 0.0
    %434 = vmatpush1.msra.mxu0 0.0
    %435 = vmatprep.subr.mxu0 0.0
    %436 = vmatpush1.msra.mxu0 0.0
    %437 = vmatprep.subr.mxu0 0.0
    %438 = vmatpush1.msra.mxu0 0.0
    %439 = vmatprep.subr.mxu0 0.0
    %440 = vmatpush1.msra.mxu0 0.0
    %441 = vmatprep.subr.mxu0 0.0
    %442 = vmatpush1.msra.mxu0 0.0
    %443 = vmatprep.subr.mxu0 0.0
    %444 = vmatpush1.msra.mxu0 0.0
    %445 = vmatprep.subr.mxu0 0.0
    %446 = vmatpush1.msra.mxu0 0.0
    %447 = vmatprep.subr.mxu0 0.0
    %448 = vmatpush1.msra.mxu0 0.0
    %449 = vmatprep.subr.mxu0 0.0
    %450 = vmatpush1.msra.mxu0 0.0
    %451 = vmatprep.subr.mxu0 0.0
    %452 = vmatpush1.msra.mxu0 0.0
    %453 = vmatprep.subr.mxu0 0.0
    %454 = vmatpush1.msra.mxu0 0.0
    %455 = vmatprep.subr.mxu0 0.0
    %456 = vmatpush1.msra.mxu0 0.0
    %457 = vmatprep.subr.mxu0 0.0
    %458 = vmatpush1.msra.mxu0 0.0
    %459 = vmatprep.subr.mxu0 0.0
    %460 = vmatpush1.msra.mxu0 0.0
    %461 = vmatprep.subr.mxu0 0.0
    %462 = vmatpush1.msra.mxu0 0.0
    %463 = vmatprep.subr.mxu0 0.0
    %464 = vmatpush1.msra.mxu0 0.0
    %465 = vmatprep.subr.mxu0 0.0
    %466 = vmatpush1.msra.mxu0 0.0
    %467 = vmatprep.subr.mxu0 0.0
    %468 = vmatpush1.msra.mxu0 0.0
    %469 = vmatprep.mubr.f32.mxu0 0.0
    %470 = vmatmul.mubr.f32.gmra.mrb[0].mxu0 %v403
    %v471 = vpop.f32.mrb[0].mxu0
    %v472 = vadd.f32 0.0, %v471
    %v473 = vpop.f32.mrb[0].mxu0
    %474 = vdwg.mxu0
    %v475 = vmul.f32 %v472, %v472
    %v476 = vsel %vm146, %v475, 0.0
    %477 = vadd.xlane.f32.xlu0 %v476
    %v478 = vpop.xlane.xlu0 %477
    %v479 = vrot.slane %v478, 4
    %v480 = vadd.f32 %v478, %v479
    %v481 = vrot.slane %v480, 2
    %v482 = vadd.f32 %v480, %v481
    %v483 = vrot.slane %v482, 1
    %v484 = vadd.f32 %v482, %v483
    %s485 = vtos %v484
    %v486 = vlaneseq
    %v487 = vand.u32 %v486, 127
    %vm488 = vcmp.eq.s32.totalorder %v487, 0
    %v489 = vstv %s126
    %v490 = vsel %vm488, %v489, 0.0
    %vm491 = vcmp.eq.s32.totalorder %v487, 1
    %v492 = vstv %s142
    %v493 = vsel %vm491, %v492, 0.0
    %v494 = vadd.f32 %v490, %v493
    %vm495 = vcmp.eq.s32.totalorder %v487, 2
    %v496 = vstv %s360
    %v497 = vsel %vm495, %v496, 0.0
    %v498 = vadd.f32 %v494, %v497
    %vm499 = vcmp.eq.s32.totalorder %v487, 3
    %v500 = vstv %s485
    %v501 = vsel %vm499, %v500, 0.0
    %v502 = vadd.f32 %v498, %v501
    %503 = vst [vmem:[#allocation13] sm:$0x1] %v502
    // Predicated region
    $region62: #{tpu_custom_call.1} parent=1 // pred_check
      _
    $region63: #{tpu_custom_call.1} parent=1 // pred_check_branch
      %505 = sbr.rel (0) target = $region65
    $region64: #{tpu_custom_call.1} parent=1 // pred_region
      %s507 = ssub.s32 16, 16
      %508 = vsyncadd [#allocation4], %s507
      %s510 = sshll.u32 [#allocation13], 4
      %s511 = int_to_ptr.vmem [resolvable:$true] %s510
      %513 = dma.vmem_to_hbm [thread:$0]  %s511, 16, %s9, [#allocation4]
    $region65: #{tpu_custom_call.1} parent=1 // pred_fallthru
      _
    // Predicated region
    $region66: #{tpu_custom_call.1} parent=1 // pred_check
      _
    $region67: #{tpu_custom_call.1} parent=1 // pred_check_branch
      %515 = sbr.rel (0) target = $region69
    $region68: #{tpu_custom_call.1} parent=1 // pred_region
      %516 = dma.done [#allocation4], 16
    $region69: #{tpu_custom_call.1} parent=1 // pred_fallthru
      _
    %517 = vsyncpa [#allocation3], 1
    %518 = vsyncpa [#allocation6], 1
    %519 = vsyncpa [#allocation9], 1
    %520 = vsyncpa [#allocation12], 1
    %521 = vsyncpa [#allocation4], 1

</llo_original>
